<compile_context>
chip_gen: v7x
topology: tpu7x:2x2x1
jax: 0.10.0
libtpu: 0.0.40
codegen_flags: <defaults>
</compile_context>

<pallas_src>
import jax
import jax.numpy as jnp
from jax.experimental import pallas as pl
from jax.experimental.pallas import tpu as pltpu

_HIDDEN = 64


def _make_kernel(compute_dtype):
    def kernel(x_ref, w1_ref, b1_ref, w2_ref, b2_ref, o_ref):
        # x_ref : (TB, F)  native input dtype (cast here, hidden under the DMA)
        # w1_ref: (F, H)   compute dtype (bf16), VMEM-resident
        # b1_ref: (1, H)   f32, resident
        # w2_ref: (1, H)   f32, resident (second Linear weight as a row vector)
        # b2_ref: (1, 1)   f32 in SMEM
        # o_ref : (TB, 1)  f32
        x = x_ref[...].astype(compute_dtype)
        # Linear 1 (MXU, f32 accumulation) + bias + ReLU
        h = jnp.dot(x, w1_ref[...], preferred_element_type=jnp.float32)
        h = jnp.maximum(h + b1_ref[...], 0.0)
        # Linear 2 as VPU multiply + lane reduction (avoids an N=1 MXU matmul)
        logits = jnp.sum(h * w2_ref[...], axis=-1, keepdims=True) + b2_ref[0, 0]
        # Sigmoid (EUP)
        o_ref[...] = jax.nn.sigmoid(logits).astype(o_ref.dtype)
    return kernel


def _vmem_capacity_bytes():
    try:
        return int(pltpu.get_tpu_info().vmem_capacity_bytes)
    except Exception:
        return 64 * 1024 * 1024   # conservative fallback (v7x per-TensorCore)


def _round_up(x, m):
    return -(-x // m) * m


def _pick_batch_tile(batch, feature_dim, x_itemsize, compute_itemsize,
                     vmem_limit_bytes):
    """Byte-capped batch tile, sized against the available VMEM budget."""
    H = _HIDDEN
    # Resident buffers (BlockSpec inputs are double-buffered even with a
    # constant index_map): w1 in compute dtype, plus b1/w2 rows + slack.
    resident = 2 * feature_dim * H * compute_itemsize
    resident += 2 * 2 * (H * 4) + 4096
    budget = max(vmem_limit_bytes - resident - (8 << 20), 2 << 20)

    # Per-row VMEM bytes: double-buffered x tile in its HBM dtype, the
    # in-kernel compute-dtype copy, f32 hidden activations, and the
    # double-buffered f32 output row (+ slack for fused intermediates).
    per_row = (2 * feature_dim * x_itemsize
               + feature_dim * compute_itemsize
               + 4 * H
               + 2 * 4 + 64)
    tb = budget // per_row

    # Guarantee >=4 grid steps on large batches (>=2 on medium ones) so v7x's
    # two TensorCores both get work and DMAs pipeline across steps, without
    # manufacturing steps out of small batches.
    if batch >= 8 * 1024:
        tb = min(tb, -(-batch // 4))
    elif batch >= 1024:
        tb = min(tb, -(-batch // 2))

    # Don't allocate tiles past the (8-row-rounded) batch.
    tb = min(tb, _round_up(batch, 8))

    # Round rows: big tiles to 256, medium to 16 (bf16 sublane packing),
    # floor at a multiple of 8 (block second-minor constraint).
    if tb >= 256:
        tb = (tb // 256) * 256
    elif tb >= 16:
        tb = (tb // 16) * 16
    else:
        tb = (tb // 8) * 8
    return int(max(8, tb))


def domain_classifier_forward(x, w1, b1, w2, b2, *, tile_batch=None,
                              compute_dtype=jnp.bfloat16):
    """x: (B, F) -> (B, 1) f32, matching DomainClassifier.forward.

    Weights use the (in, out) layout: w1 (F, 64), b1 (64,)|(1,64),
    w2 (64, 1)|(1,64), b2 scalar|(1,)|(1,1).
    """
    B, F = x.shape
    H = _HIDDEN
    assert w1.shape == (F, H)

    # Canonicalize parameter layouts (tiny arrays; cast once in the wrapper).
    w1_c = jnp.asarray(w1).astype(compute_dtype)
    b1_row = jnp.asarray(b1, jnp.float32).reshape(1, H)
    w2_row = jnp.asarray(w2, jnp.float32).reshape(1, H)
    b2_s = jnp.asarray(b2, jnp.float32).reshape(1, 1)

    # Generation-aware VMEM budget (~3/4 of capacity, with headroom).
    vmem_cap = _vmem_capacity_bytes()
    vmem_limit = min((vmem_cap * 3) // 4, vmem_cap - (8 << 20))
    vmem_limit = int(max(vmem_limit, 32 << 20))

    x_itemsize = jnp.dtype(x.dtype).itemsize
    c_itemsize = jnp.dtype(compute_dtype).itemsize
    if tile_batch is None:
        tb = _pick_batch_tile(B, F, x_itemsize, c_itemsize, vmem_limit)
    else:
        tb = max(8, (int(tile_batch) // 8) * 8)

    # Ragged last block handled by Pallas (masked writes); no jnp.pad of x.
    grid = (pl.cdiv(B, tb),)

    out = pl.pallas_call(
        _make_kernel(compute_dtype),
        out_shape=jax.ShapeDtypeStruct((B, 1), jnp.float32),
        grid_spec=pltpu.PrefetchScalarGridSpec(
            num_scalar_prefetch=0,
            grid=grid,
            in_specs=[
                pl.BlockSpec((tb, F), lambda i: (i, 0)),            # x: streamed
                pl.BlockSpec((F, H), lambda i: (0, 0)),             # w1: resident
                pl.BlockSpec((1, H), lambda i: (0, 0)),             # b1: resident
                pl.BlockSpec((1, H), lambda i: (0, 0)),             # w2 row: resident
                pl.BlockSpec(memory_space=pltpu.MemorySpace.SMEM),  # b2 scalar
            ],
            out_specs=pl.BlockSpec((tb, 1), lambda i: (i, 0)),
        ),
        compiler_params=pltpu.CompilerParams(
            dimension_semantics=("parallel",),
            vmem_limit_bytes=vmem_limit,
        ),
    )(x, w1_c, b1_row, w2_row, b2_s)
    return out


def init_params(key, feature_dim, hidden=_HIDDEN):
    """Deterministic init mimicking torch.nn.Linear default (uniform +-1/sqrt(fan_in))."""
    k1, k2, k3, k4 = jax.random.split(key, 4)
    lim1 = 1.0 / jnp.sqrt(feature_dim)
    lim2 = 1.0 / jnp.sqrt(hidden)
    w1 = jax.random.uniform(k1, (feature_dim, hidden), jnp.float32, -lim1, lim1)
    b1 = jax.random.uniform(k2, (1, hidden), jnp.float32, -lim1, lim1)
    w2 = jax.random.uniform(k3, (hidden, 1), jnp.float32, -lim2, lim2)
    b2 = jax.random.uniform(k4, (1, 1), jnp.float32, -lim2, lim2)
    return w1, b1, w2, b2


def _reference(x, w1, b1, w2, b2, compute_dtype=jnp.bfloat16):
    # Same math / same bf16 cast as the kernel, in plain JAX.
    xc = x.astype(compute_dtype)
    w1c = w1.astype(compute_dtype)
    h = jnp.dot(xc, w1c, preferred_element_type=jnp.float32)
    h = jnp.maximum(h + b1.reshape(1, -1).astype(jnp.float32), 0.0)
    logits = h @ w2.reshape(-1, 1).astype(jnp.float32) + jnp.asarray(b2, jnp.float32).reshape(1, 1)
    return jax.nn.sigmoid(logits)


if __name__ == "__main__":
    key = jax.random.PRNGKey(0)
    kx, kp, kx2 = jax.random.split(key, 3)

    batch, feature_dim = 8, 32
    x = jax.random.normal(kx, (batch, feature_dim), jnp.float32)
    w1, b1, w2, b2 = init_params(kp, feature_dim)

    out = domain_classifier_forward(x, w1, b1, w2, b2)
    out = jax.block_until_ready(out)
    assert out.shape == (batch, 1)
    ref = _reference(x, w1, b1, w2, b2)
    assert jnp.allclose(out, ref, atol=2e-3, rtol=2e-3), "mismatch on batch=8"
    # Sanity-check against the pure f32 path (loose tol due to bf16 matmul inputs).
    ref_f32 = jax.nn.sigmoid(jnp.maximum(x @ w1 + b1, 0.0) @ w2 + b2)
    assert jnp.allclose(out, ref_f32, atol=2e-2), "bf16 drift too large"

    # Exercise batch tiling + the ragged last block (B not a multiple of TB,
    # handled by Pallas without padding x).
    batch2 = 37
    x2 = jax.random.normal(kx2, (batch2, feature_dim), jnp.float32)
    out2 = jax.block_until_ready(
        domain_classifier_forward(x2, w1, b1, w2, b2, tile_batch=16))
    assert out2.shape == (batch2, 1)
    ref2 = _reference(x2, w1, b1, w2, b2)
    assert jnp.allclose(out2, ref2, atol=2e-3, rtol=2e-3), "mismatch on ragged batch"

    print("KERNEL_OK")
</pallas_src>

<mosaic_0001>
module attributes {stable_mosaic.version = 11 : i64} {
  func.func @kernel(%arg0: i32, %arg1: memref<8x32xf32, #tpu.memory_space<vmem>>, %arg2: memref<32x64xbf16, #tpu.memory_space<vmem>>, %arg3: memref<1x64xf32, #tpu.memory_space<vmem>>, %arg4: memref<1x64xf32, #tpu.memory_space<vmem>>, %arg5: memref<1x1xf32, #tpu.memory_space<smem>>, %arg6: memref<8x1xf32, #tpu.memory_space<vmem>>) attributes {dimension_semantics = [#tpu.dimension_semantics<parallel>], iteration_bounds = array<i64: 1>, scalar_prefetch = 0 : i64, scratch_operands = 0 : i64, tpu.core_type = #tpu.core_type<tc>, window_params = [{transform_indices = @transform_0, window_bounds = array<i64: 8, 32>}, {pipeline_mode = #tpu.pipeline_mode<synchronous>, transform_indices = @transform_1, window_bounds = array<i64: 32, 64>}, {pipeline_mode = #tpu.pipeline_mode<synchronous>, transform_indices = @transform_2, window_bounds = array<i64: 1, 64>}, {pipeline_mode = #tpu.pipeline_mode<synchronous>, transform_indices = @transform_3, window_bounds = array<i64: 1, 64>}, {transform_indices = @transform_4, window_bounds = array<i64: 1, 1>}, {transform_indices = @transform_5, window_bounds = array<i64: 8, 1>}]} {
    %c0 = arith.constant 0 : index
    %c0_0 = arith.constant 0 : index
    %0 = vector.load %arg1[%c0, %c0_0] : memref<8x32xf32, #tpu.memory_space<vmem>>, vector<8x32xf32>
    %1 = arith.truncf %0 : vector<8x32xf32> to vector<8x32xbf16>
    %c0_1 = arith.constant 0 : index
    %c0_2 = arith.constant 0 : index
    %2 = vector.load %arg2[%c0_1, %c0_2] : memref<32x64xbf16, #tpu.memory_space<vmem>>, vector<32x64xbf16>
    %cst = arith.constant dense<0.000000e+00> : vector<8x64xf32>
    %3 = tpu.matmul %1, %2, %cst {dimension_numbers = #tpu.dot_dimension_numbers<[1], [0], [0], [1], [0, 0, 1, 1], [], []>} : vector<8x32xbf16>, vector<32x64xbf16>, vector<8x64xf32> -> vector<8x64xf32>
    %c0_3 = arith.constant 0 : index
    %c0_4 = arith.constant 0 : index
    %4 = vector.load %arg3[%c0_3, %c0_4] : memref<1x64xf32, #tpu.memory_space<vmem>>, vector<1x64xf32>
    %5 = vector.broadcast %4 : vector<1x64xf32> to vector<8x64xf32>
    %6 = arith.addf %3, %5 : vector<8x64xf32>
    %cst_5 = arith.constant 0.000000e+00 : f32
    %7 = vector.broadcast %cst_5 : f32 to vector<8x64xf32>
    %8 = arith.maximumf %6, %7 : vector<8x64xf32>
    %c0_6 = arith.constant 0 : index
    %c0_7 = arith.constant 0 : index
    %9 = vector.load %arg4[%c0_6, %c0_7] : memref<1x64xf32, #tpu.memory_space<vmem>>, vector<1x64xf32>
    %10 = vector.broadcast %9 : vector<1x64xf32> to vector<8x64xf32>
    %11 = arith.mulf %8, %10 : vector<8x64xf32>
    %cst_8 = arith.constant dense<0.000000e+00> : vector<8xf32>
    %12 = vector.multi_reduction <add>, %11, %cst_8 [1] : vector<8x64xf32> to vector<8xf32>
    %13 = vector.shape_cast %12 : vector<8xf32> to vector<8x1xf32>
    %c0_9 = arith.constant 0 : index
    %c0_10 = arith.constant 0 : index
    %14 = memref.load %arg5[%c0_9, %c0_10] : memref<1x1xf32, #tpu.memory_space<smem>>
    %15 = vector.broadcast %14 : f32 to vector<8x1xf32>
    %16 = arith.addf %13, %15 : vector<8x1xf32>
    %17 = arith.negf %16 : vector<8x1xf32>
    %18 = math.exp %17 : vector<8x1xf32>
    %cst_11 = arith.constant 1.000000e+00 : f32
    %19 = vector.broadcast %cst_11 : f32 to vector<8x1xf32>
    %20 = arith.addf %19, %18 : vector<8x1xf32>
    %21 = arith.divf %19, %20 : vector<8x1xf32>
    %c0_12 = arith.constant 0 : index
    %c0_13 = arith.constant 0 : index
    %22 = vector.load %arg6[%c0_12, %c0_13] : memref<8x1xf32, #tpu.memory_space<vmem>>, vector<8x1xf32>
    tpu.vector_store %arg6[%c0_12, %c0_13], %21 {strides = array<i32>} : memref<8x1xf32, #tpu.memory_space<vmem>>, vector<8x1xf32>,
    return
  }
  func.func @transform_0(%arg0: i32) -> (i32, i32) {
    %c0_i32 = arith.constant 0 : i32
    %c0_i32_0 = arith.constant 0 : i32
    return %arg0, %c0_i32 : i32, i32
  }
  func.func @transform_1(%arg0: i32) -> (i32, i32) {
    %c0_i32 = arith.constant 0 : i32
    %c0_i32_0 = arith.constant 0 : i32
    %c0_i32_1 = arith.constant 0 : i32
    return %c0_i32, %c0_i32_0 : i32, i32
  }
  func.func @transform_2(%arg0: i32) -> (i32, i32) {
    %c0_i32 = arith.constant 0 : i32
    %c0_i32_0 = arith.constant 0 : i32
    %c0_i32_1 = arith.constant 0 : i32
    return %c0_i32, %c0_i32_0 : i32, i32
  }
  func.func @transform_3(%arg0: i32) -> (i32, i32) {
    %c0_i32 = arith.constant 0 : i32
    %c0_i32_0 = arith.constant 0 : i32
    %c0_i32_1 = arith.constant 0 : i32
    return %c0_i32, %c0_i32_0 : i32, i32
  }
  func.func @transform_4(%arg0: i32) -> (i32, i32) {
    %c0_i32 = arith.constant 0 : i32
    %c0_i32_0 = arith.constant 0 : i32
    %c0_i32_1 = arith.constant 0 : i32
    return %c0_i32, %c0_i32_0 : i32, i32
  }
  func.func @transform_5(%arg0: i32) -> (i32, i32) {
    %c0_i32 = arith.constant 0 : i32
    %c0_i32_0 = arith.constant 0 : i32
    return %arg0, %c0_i32 : i32, i32
  }
}

</mosaic_0001>

<llo_original>
// kernel: tpu_custom_call.1
$region0: #{tpu_custom_call.1}
  #allocation0 [shape = 'u32[]', space=smem, size = 0x4, offset = 0x4, fixed_abs, tag = 'smem constant byte address 0x4 - core index']
  #allocation1 [shape = 'u32[144,128]{1,0:T(1,128)}', space=vmem, size = 0x12000, scoped, tag = 'internal scratch']
  #allocation2 [shape = 'f32[1,1]{1,0:T(1,128)S(6)}', space=smem, size = 0x200, scoped, tag = 'scoped memory for tpu_custom_call.1']
  %s0 = inlined_call_operand.hbm [shape: f32[8,32], index: 0, kind: input, shape index: {}]
  %s1 = inlined_call_operand.hbm [shape: bf16[32,64], index: 1, kind: input, shape index: {}]
  %s2 = inlined_call_operand.vmem [shape: f32[1,64], index: 2, kind: input, shape index: {}]
  %s3 = inlined_call_operand.vmem [shape: f32[1,64], index: 3, kind: input, shape index: {}]
  %s4 = inlined_call_operand.<no memory space> [shape: f32[1,1], index: 4, kind: input, shape index: {}]
  %s5 = inlined_call_operand.vmem [shape: f32[8,1], index: 5, kind: output, shape index: {}]
  %s6 = sld [smem:[#allocation0]]
  $region38: #{tpu_custom_call.1} parent=0
    _
  %s8 = ssub.s32 1, %s6
  %s9 = scalar_select 0, %s8, %s6
  %10 = sst [smem:[#allocation2]] %s4
  $region1: #{tpu_custom_call.1} parent=0
    #allocation3 [shape = 'u8[4096]{0}', space=vmem, size = 0x1000, scoped, tag = 'input window, operand 0, single buffered']
    #allocation4 [shape = 's32[1]{0}', space=sflag, size = 0x4, scoped, tag = 'scoped memory for tpu_custom_call.1']
    #allocation5 [shape = 'u8[8192]{0}', space=vmem, size = 0x2000, scoped, tag = 'input window, operand 1, single buffered']
    #allocation6 [shape = 's32[1]{0}', space=sflag, size = 0x4, scoped, tag = 'scoped memory for tpu_custom_call.1']
    %11 = vsyncpa [#allocation4], 0
    %12 = vsyncpa [#allocation6], 0
    // Predicated region
    $region2: #{tpu_custom_call.1} parent=1 // pred_check
      _
    $region3: #{tpu_custom_call.1} parent=1 // pred_check_branch
      %14 = sbr.rel (0) target = $region5
    $region4: #{tpu_custom_call.1} parent=1 // pred_region
      %s16 = ssub.s32 128, 128
      %17 = vsyncadd [#allocation4], %s16
      %s19 = sshll.u32 [#allocation3], 4
      %s20 = int_to_ptr.vmem [resolvable:$true] %s19
      %22 = dma.hbm_to_vmem [thread:$0]  %s0, 128, %s20, [#allocation4]
    $region5: #{tpu_custom_call.1} parent=1 // pred_fallthru
      _
    // Predicated region
    $region6: #{tpu_custom_call.1} parent=1 // pred_check
      _
    $region7: #{tpu_custom_call.1} parent=1 // pred_check_branch
      %24 = sbr.rel (0) target = $region9
    $region8: #{tpu_custom_call.1} parent=1 // pred_region
      %s26 = ssub.s32 256, 256
      %27 = vsyncadd [#allocation6], %s26
      %s28 = sshll.u32 [#allocation5], 4
      %s29 = int_to_ptr.vmem [resolvable:$true] %s28
      %34 = dma.hbm_to_vmem [thread:$0]  %s1, 256, %s29, [#allocation6], 64, 64, 4
    $region9: #{tpu_custom_call.1} parent=1 // pred_fallthru
      _
    // Predicated region
    $region10: #{tpu_custom_call.1} parent=1 // pred_check
      _
    $region11: #{tpu_custom_call.1} parent=1 // pred_check_branch
      %36 = sbr.rel (0) target = $region13
    $region12: #{tpu_custom_call.1} parent=1 // pred_region
      _
    $region13: #{tpu_custom_call.1} parent=1 // pred_fallthru
      _
    // Predicated region
    $region14: #{tpu_custom_call.1} parent=1 // pred_check
      _
    $region15: #{tpu_custom_call.1} parent=1 // pred_check_branch
      %38 = sbr.rel (0) target = $region17
    $region16: #{tpu_custom_call.1} parent=1 // pred_region
      _
    $region17: #{tpu_custom_call.1} parent=1 // pred_fallthru
      _
    // Predicated region
    $region18: #{tpu_custom_call.1} parent=1 // pred_check
      _
    $region19: #{tpu_custom_call.1} parent=1 // pred_check_branch
      %40 = sbr.rel (0) target = $region21
    $region20: #{tpu_custom_call.1} parent=1 // pred_region
      _
    $region21: #{tpu_custom_call.1} parent=1 // pred_fallthru
      _
    // Predicated region
    $region22: #{tpu_custom_call.1} parent=1 // pred_check
      _
    $region23: #{tpu_custom_call.1} parent=1 // pred_check_branch
      %42 = sbr.rel (0) target = $region25
    $region24: #{tpu_custom_call.1} parent=1 // pred_region
      %43 = dma.done [#allocation4], 128
    $region25: #{tpu_custom_call.1} parent=1 // pred_fallthru
      _
    // Predicated region
    $region26: #{tpu_custom_call.1} parent=1 // pred_check
      _
    $region27: #{tpu_custom_call.1} parent=1 // pred_check_branch
      %45 = sbr.rel (0) target = $region29
    $region28: #{tpu_custom_call.1} parent=1 // pred_region
      %46 = dma.done [#allocation6], 256
    $region29: #{tpu_custom_call.1} parent=1 // pred_fallthru
      _
    %v48 = vld [vmem:[#allocation3] sm:$0xff]
    %v49 = vpack.c.bf16 %v48, %v48
    %v50 = vld [vmem:[#allocation5] sm:$0xf]
    %v51 = vld [vmem:[#allocation5 + $0x4] sm:$0xf]
    %v52 = vld [vmem:[#allocation5 + $0x8] sm:$0xf]
    %v53 = vld [vmem:[#allocation5 + $0xc] sm:$0xf]
    %v54 = vld [vmem:[%s2] sm:$0x1]
    %v56 = vlaneseq
    %v57 = vshrl.u32 %v56, 7
    %v58 = vsub.s32 0, %v57
    %v59 = vrot.slane %v54, %v58
    %v65 = vunpack.c.l.b16 %v50
    %v66 = vunpack.c.l.b16 %v51
    %v67 = vunpack.c.l.b16 %v52
    %v68 = vunpack.c.l.b16 %v53
    %v69 = vpack.c.b16 %v66, %v65
    %v70 = vpack.c.b16 %v68, %v67
    %vm73 = vcmask 261120
    %v75 = vsel %vm73, %v49, 0
    %77 = vmatprep.subr.bf16.mxu0 0
    %78 = vmatpush1.bf16.msra.mxu0 %v69
    %79 = vmatprep.subr.bf16.mxu0 0
    %80 = vmatpush1.bf16.msra.mxu0 %v70
    %81 = vmatprep.subr.bf16.mxu0 0
    %82 = vmatpush1.bf16.msra.mxu0 0
    %83 = vmatprep.subr.bf16.mxu0 0
    %84 = vmatpush1.bf16.msra.mxu0 0
    %85 = vmatprep.subr.bf16.mxu0 0
    %86 = vmatpush1.bf16.msra.mxu0 0
    %87 = vmatprep.subr.bf16.mxu0 0
    %88 = vmatpush1.bf16.msra.mxu0 0
    %89 = vmatprep.subr.bf16.mxu0 0
    %90 = vmatpush1.bf16.msra.mxu0 0
    %91 = vmatprep.subr.bf16.mxu0 0
    %92 = vmatpush1.bf16.msra.mxu0 0
    %93 = vmatprep.subr.bf16.mxu0 0
    %94 = vmatpush1.bf16.msra.mxu0 0
    %95 = vmatprep.subr.bf16.mxu0 0
    %96 = vmatpush1.bf16.msra.mxu0 0
    %97 = vmatprep.subr.bf16.mxu0 0
    %98 = vmatpush1.bf16.msra.mxu0 0
    %99 = vmatprep.subr.bf16.mxu0 0
    %100 = vmatpush1.bf16.msra.mxu0 0
    %101 = vmatprep.subr.bf16.mxu0 0
    %102 = vmatpush1.bf16.msra.mxu0 0
    %103 = vmatprep.subr.bf16.mxu0 0
    %104 = vmatpush1.bf16.msra.mxu0 0
    %105 = vmatprep.subr.bf16.mxu0 0
    %106 = vmatpush1.bf16.msra.mxu0 0
    %107 = vmatprep.subr.bf16.mxu0 0
    %108 = vmatpush1.bf16.msra.mxu0 0
    %109 = vmatprep.mubr.bf16.mxu0 0
    %110 = vmatmul.mubr.bf16.gmra.mrb[0].mxu0 %v75
    %v111 = vpop.f32.mrb[0].mxu0
    %v112 = vadd.f32 %v59, %v111
    %v113 = vpop.f32.mrb[0].mxu0
    %v114 = vpop.f32.mrb[0].mxu0
    %v115 = vpop.f32.mrb[0].mxu0
    %116 = vdwg.mxu0
    %v117 = vmax.f32 %v112, 0.0
    %v118 = vld [vmem:[%s3] sm:$0x1]
    %v120 = vlaneseq
    %v121 = vshrl.u32 %v120, 7
    %v122 = vsub.s32 0, %v121
    %v123 = vrot.slane %v118, %v122
    %v125 = vmul.f32 %v117, %v123
    %vm126 = vcmask 523264
    %v127 = vsel %vm126, %v125, 0.0
    %128 = vadd.xlane.f32.xlu0 %v127
    %v129 = vpop.xlane.xlu0 %128
    %s130 = sld [smem:[#allocation2]]
    %v131 = vstv %s130
    %v132 = vadd.f32 %v129, %v131
    %v133 = vxor.u32 %v132, 2147483648
    %v134 = vmul.f32 %v133, 1.442695
    %v135 = vpow.pop %v134
    %v136 = vadd.f32 %v135, 1.0
    %v137 = vrcp.pop %v136
    %v138 = vmul.f32 1.0, %v137
    %vm139 = vcmask 7168
    %140 = vst.msk [vmem:[%s5] sm:$0xff] %vm139, %v138
    // Predicated region
    $region30: #{tpu_custom_call.1} parent=1 // pred_check
      _
    $region31: #{tpu_custom_call.1} parent=1 // pred_check_branch
      %142 = sbr.rel (0) target = $region33
    $region32: #{tpu_custom_call.1} parent=1 // pred_region
      _
    $region33: #{tpu_custom_call.1} parent=1 // pred_fallthru
      _
    // Predicated region
    $region34: #{tpu_custom_call.1} parent=1 // pred_check
      _
    $region35: #{tpu_custom_call.1} parent=1 // pred_check_branch
      %144 = sbr.rel (0) target = $region37
    $region36: #{tpu_custom_call.1} parent=1 // pred_region
      _
    $region37: #{tpu_custom_call.1} parent=1 // pred_fallthru
      _
    %145 = vsyncpa [#allocation4], 1
    %146 = vsyncpa [#allocation6], 1

</llo_original>
